<compile_context>
chip_gen: v5e
topology: v5e:2x2
jax: 0.10.0
libtpu: 0.0.40
codegen_flags: <defaults>
</compile_context>

<pallas_src>
import jax
import jax.numpy as jnp
import numpy as np
from jax.experimental import pallas as pl
from jax.experimental.pallas import tpu as pltpu

_BN_EPS = 1e-5


def _round_up(v, m):
    return (v + m - 1) // m * m


def _pick_row_tile(h, row_tile):
    if row_tile is not None:
        if h % row_tile != 0:
            raise ValueError(f"row_tile={row_tile} must divide H={h}")
        return row_tile
    for th in range(min(h, 16), 0, -1):
        if h % th == 0:
            return th
    return h


def _vmem_limit(block_bytes):
    # Size the scoped-VMEM request from the actual per-step block bytes (double-buffered,
    # with headroom), capped well under v7x's 64 MiB physical per-TensorCore budget.
    return int(min(48 * 2 ** 20, max(32 * 2 ** 20, 3 * block_bytes)))


# ---------------------------------------------------------------------------
# Kernel 1: 3x3 conv (pad=1) + per-channel partial BatchNorm statistics.
# ---------------------------------------------------------------------------
def _conv3x3_stats_kernel(xwin_ref, w_ref, y_ref, stats_ref):
    # xwin_ref : (th+2, Wpad, Cin)  zero-padded halo window (matmul dtype)
    # w_ref    : (9*Cin, Cout)      weight, rows ordered (ky, kx, cin)   (matmul dtype)
    # y_ref    : (th, W, Cout)      pre-BN conv output (f32)
    # stats_ref: (2, Cout)          per-image partial [sum; sum of squares] (f32),
    #                               accumulated across the row-tile grid axis.
    th, w, cout = y_ref.shape
    cin = xwin_ref.shape[-1]

    xwin = xwin_ref[...]
    acc = jnp.zeros((th * w, cout), jnp.float32)
    for ky in range(3):
        # Per-ky im2col row (K = 3*Cin per MXU push): one concat of three taps instead of a
        # full 9-tap buffer, accumulated into f32 acc.
        row = jnp.concatenate(
            [xwin[ky:ky + th, kx:kx + w, :] for kx in range(3)], axis=-1)
        acc = acc + jnp.dot(row.reshape(th * w, 3 * cin),
                            w_ref[ky * 3 * cin:(ky + 1) * 3 * cin, :],
                            preferred_element_type=jnp.float32)

    y_ref[...] = acc.reshape(th, w, cout)

    psum = jnp.sum(acc, axis=0, keepdims=True)
    psq = jnp.sum(acc * acc, axis=0, keepdims=True)

    @pl.when(pl.program_id(1) == 0)
    def _():
        stats_ref[...] = jnp.zeros_like(stats_ref)

    stats_ref[...] += jnp.concatenate([psum, psq], axis=0)


# ---------------------------------------------------------------------------
# Kernel 2: BN1 + leaky_relu + shortcut (identity / learned 1x1) + residual add.
# ---------------------------------------------------------------------------
def _bn_act_add_identity_kernel(y_ref, sc_ref, sh_ref, x_ref, out_ref):
    a = y_ref[...] * sc_ref[...] + sh_ref[...]
    a = jnp.where(a > 0, a, 0.2 * a)
    out_ref[...] = x_ref[...].astype(jnp.float32) + a


def _bn_act_add_learned_kernel(y_ref, sc_ref, sh_ref, x_ref, ws_ref, out_ref):
    th, w, cout = out_ref.shape
    cin = x_ref.shape[-1]
    a = y_ref[...] * sc_ref[...] + sh_ref[...]
    a = jnp.where(a > 0, a, 0.2 * a)
    xs = jnp.dot(x_ref[...].astype(ws_ref.dtype).reshape(th * w, cin), ws_ref[...],
                 preferred_element_type=jnp.float32)
    out_ref[...] = xs.reshape(th, w, cout) + a


# ---------------------------------------------------------------------------
# pallas_call wrappers
# ---------------------------------------------------------------------------
def _build_row_windows(a_nhwc, th):
    """Zero-pad H,W by 1 (3x3, pad=1), round the sublane (W) axis up to a multiple of 8,
    and stack overlapping row windows: (N,H,W,C) -> (N, H/th, th+2, Wpad, C)."""
    n, h, w, c = a_nhwc.shape
    wpad = _round_up(w + 2, 8)
    a = jnp.pad(a_nhwc, ((0, 0), (1, 1), (1, wpad - w - 1), (0, 0)))
    t = h // th
    wins = [a[:, i * th:i * th + th + 2] for i in range(t)]
    return jnp.stack(wins, axis=1)


def _conv3x3_bn_stats(xwin, w_mat, h, w, th):
    n, t, thp2, wpad, cin = xwin.shape
    k, cout = w_mat.shape
    blk_bytes = (thp2 * wpad * cin * xwin.dtype.itemsize
                 + k * cout * w_mat.dtype.itemsize
                 + th * w * cout * 4 + 2 * cout * 4)
    flops = 2 * n * h * w * k * cout + 4 * n * h * w * cout
    bytes_accessed = (xwin.size * xwin.dtype.itemsize
                      + w_mat.size * w_mat.dtype.itemsize
                      + n * h * w * cout * 4 + n * 2 * cout * 4)
    y_pre, stats = pl.pallas_call(
        _conv3x3_stats_kernel,
        grid=(n, t),
        in_specs=[
            pl.BlockSpec((None, None, thp2, wpad, cin), lambda i, j: (i, j, 0, 0, 0)),
            pl.BlockSpec((k, cout), lambda i, j: (0, 0)),
        ],
        out_specs=[
            pl.BlockSpec((None, th, w, cout), lambda i, j: (i, j, 0, 0)),
            pl.BlockSpec((None, 2, cout), lambda i, j: (i, 0, 0)),
        ],
        out_shape=[
            jax.ShapeDtypeStruct((n, h, w, cout), jnp.float32),
            jax.ShapeDtypeStruct((n, 2, cout), jnp.float32),
        ],
        compiler_params=pltpu.CompilerParams(
            dimension_semantics=("parallel", "arbitrary"),
            vmem_limit_bytes=_vmem_limit(blk_bytes)),
        cost_estimate=pl.CostEstimate(flops=int(flops), transcendentals=0,
                                      bytes_accessed=int(bytes_accessed)),
    )(xwin, w_mat)
    return y_pre, stats


def _finalize_bn(stats, gamma, beta, nhw):
    s = jnp.sum(stats, axis=0)                        # combine per-image partials
    mean = s[0] / nhw
    var = jnp.maximum(s[1] / nhw - mean * mean, 0.0)
    # TODO(synk): sum/sumsq in f32 can cancel when |mean| >> std; a Welford-style merge of
    #             per-tile partials (and SyncBN's cross-device all-reduce) would slot in here.
    scale = gamma.astype(jnp.float32) * jax.lax.rsqrt(var + _BN_EPS)
    shift = beta.astype(jnp.float32) - mean * scale
    return scale, shift


def _bn_act_shortcut(y_pre, scale, shift, x_nhwc, ws_mat, th):
    n, h, w, cout = y_pre.shape
    cin = x_nhwc.shape[-1]
    t = h // th
    learned = ws_mat is not None
    sc = scale.reshape(1, 1, cout)
    sh = shift.reshape(1, 1, cout)

    in_specs = [
        pl.BlockSpec((None, th, w, cout), lambda i, j: (i, j, 0, 0)),
        pl.BlockSpec((1, 1, cout), lambda i, j: (0, 0, 0)),
        pl.BlockSpec((1, 1, cout), lambda i, j: (0, 0, 0)),
        pl.BlockSpec((None, th, w, cin), lambda i, j: (i, j, 0, 0)),
    ]
    args = [y_pre, sc, sh, x_nhwc]
    if learned:
        in_specs.append(pl.BlockSpec((cin, cout), lambda i, j: (0, 0)))
        args.append(ws_mat)
        kernel = _bn_act_add_learned_kernel
    else:
        kernel = _bn_act_add_identity_kernel

    blk_bytes = (th * w * cout * 4 + th * w * cin * x_nhwc.dtype.itemsize
                 + th * w * cout * 4
                 + (cin * cout * ws_mat.dtype.itemsize if learned else 0))
    flops = 4 * n * h * w * cout + (2 * n * h * w * cin * cout if learned
                                    else n * h * w * cout)
    bytes_accessed = (y_pre.size * 4 + x_nhwc.size * x_nhwc.dtype.itemsize
                      + n * h * w * cout * 4)

    return pl.pallas_call(
        kernel,
        grid=(n, t),
        in_specs=in_specs,
        out_specs=pl.BlockSpec((None, th, w, cout), lambda i, j: (i, j, 0, 0)),
        out_shape=jax.ShapeDtypeStruct((n, h, w, cout), jnp.float32),
        compiler_params=pltpu.CompilerParams(
            dimension_semantics=("parallel", "parallel"),
            vmem_limit_bytes=_vmem_limit(blk_bytes)),
        cost_estimate=pl.CostEstimate(flops=int(flops), transcendentals=0,
                                      bytes_accessed=int(bytes_accessed)),
    )(*args)


# ---------------------------------------------------------------------------
# Forward pass (NHWC native; NCHW convenience wrapper for PyTorch-layout parity).
# ---------------------------------------------------------------------------
def nons_block_forward_nhwc(x_nhwc, params, *, matmul_dtype=jnp.bfloat16, row_tile=None):
    n, h, w, cin = x_nhwc.shape
    w0, w1 = params["w0"], params["w1"]
    cmid, cout = w0.shape[0], w1.shape[0]
    learned = "ws" in params            # PyTorch: identity shortcut when fin == fout
    th = _pick_row_tile(h, row_tile)
    nhw = n * h * w

    x = x_nhwc.astype(jnp.float32)

    # spectral-normalized OIHW weights -> (ky, kx, cin, cout) matmul layout, MXU dtype
    w0_mat = jnp.transpose(w0, (2, 3, 1, 0)).reshape(9 * cin, cmid).astype(matmul_dtype)
    w1_mat = jnp.transpose(w1, (2, 3, 1, 0)).reshape(9 * cmid, cout).astype(matmul_dtype)

    # ---- conv_0 + BN0 statistics (pass 1) -----------------------------------
    xwin = _build_row_windows(x, th).astype(matmul_dtype)
    y0_pre, stats0 = _conv3x3_bn_stats(xwin, w0_mat, h, w, th)
    scale0, shift0 = _finalize_bn(stats0, params["gamma0"], params["beta0"], nhw)

    # ---- BN0 + leaky_relu (pass 2), fused by XLA into conv_1's window gather -
    y0 = y0_pre * scale0.reshape(1, 1, 1, cmid) + shift0.reshape(1, 1, 1, cmid)
    y0 = jnp.where(y0 > 0, y0, 0.2 * y0)

    # ---- conv_1 + BN1 statistics (pass 1) -----------------------------------
    y0win = _build_row_windows(y0, th).astype(matmul_dtype)
    y1_pre, stats1 = _conv3x3_bn_stats(y0win, w1_mat, h, w, th)
    scale1, shift1 = _finalize_bn(stats1, params["gamma1"], params["beta1"], nhw)

    # ---- BN1 + leaky_relu + shortcut + residual add (fused Pallas epilogue) --
    ws_mat = None
    if learned:
        ws_mat = jnp.transpose(params["ws"][:, :, 0, 0], (1, 0)).astype(matmul_dtype)
    return _bn_act_shortcut(y1_pre, scale1, shift1, x, ws_mat, th)


def nons_block_forward(x_nchw, params, *, matmul_dtype=jnp.bfloat16, row_tile=None):
    """NCHW convenience wrapper (PyTorch layout).  Prefer the NHWC entry point so the
    layout change is folded into producers/consumers instead of standalone transposes."""
    x = jnp.transpose(x_nchw, (0, 2, 3, 1))
    out = nons_block_forward_nhwc(x, params, matmul_dtype=matmul_dtype, row_tile=row_tile)
    return jnp.transpose(out, (0, 3, 1, 2))


# ---------------------------------------------------------------------------
# Deterministic parameter construction (spectral norm as a weight reparameterization).
# ---------------------------------------------------------------------------
def _spectral_normalize(w, key, n_iters=8):
    w_mat = w.reshape(w.shape[0], -1)
    u = jax.random.normal(key, (w.shape[0],), dtype=w.dtype)
    u = u / (jnp.linalg.norm(u) + 1e-12)
    v = None
    for _ in range(n_iters):
        v = w_mat.T @ u
        v = v / (jnp.linalg.norm(v) + 1e-12)
        u = w_mat @ v
        u = u / (jnp.linalg.norm(u) + 1e-12)
    sigma = u @ (w_mat @ v)
    return w / sigma


def make_params(fin, fout, key):
    fmid = min(fin, fout)
    keys = jax.random.split(key, 6)
    w0 = 0.1 * jax.random.normal(keys[0], (fmid, fin, 3, 3), jnp.float32)
    w1 = 0.1 * jax.random.normal(keys[1], (fout, fmid, 3, 3), jnp.float32)
    params = {
        "w0": _spectral_normalize(w0, keys[3]),
        "w1": _spectral_normalize(w1, keys[4]),
        # PyTorch BatchNorm affine defaults: gamma = 1, beta = 0
        "gamma0": jnp.ones((fmid,), jnp.float32),
        "beta0": jnp.zeros((fmid,), jnp.float32),
        "gamma1": jnp.ones((fout,), jnp.float32),
        "beta1": jnp.zeros((fout,), jnp.float32),
    }
    if fin != fout:   # learned 1x1 shortcut only when fin != fout (matches PyTorch)
        ws = 0.1 * jax.random.normal(keys[2], (fout, fin, 1, 1), jnp.float32)
        params["ws"] = _spectral_normalize(ws, keys[5])
    return params


# ---------------------------------------------------------------------------
# Pure-JAX reference (optionally with matching bf16 matmul-operand casting).
# ---------------------------------------------------------------------------
def reference_forward(x, p, matmul_dtype=jnp.float32):
    def conv(t, w, pad):
        return jax.lax.conv_general_dilated(
            t.astype(matmul_dtype), w.astype(matmul_dtype), (1, 1),
            [(pad, pad), (pad, pad)],
            dimension_numbers=("NCHW", "OIHW", "NCHW"),
            preferred_element_type=jnp.float32)

    def bn(t, g, b):
        m = jnp.mean(t, axis=(0, 2, 3), keepdims=True)
        v = jnp.mean((t - m) ** 2, axis=(0, 2, 3), keepdims=True)
        return ((t - m) * jax.lax.rsqrt(v + _BN_EPS) * g.reshape(1, -1, 1, 1)
                + b.reshape(1, -1, 1, 1))

    lrelu = lambda t: jnp.where(t > 0, t, 0.2 * t)
    dx = lrelu(bn(conv(x, p["w0"], 1), p["gamma0"], p["beta0"]))
    dx = lrelu(bn(conv(dx, p["w1"], 1), p["gamma1"], p["beta1"]))
    xs = conv(x, p["ws"], 0) if "ws" in p else x
    return xs + dx


if __name__ == "__main__":
    key = jax.random.PRNGKey(0)
    kx, kp, kp2 = jax.random.split(key, 3)

    n, h, w = 2, 16, 16
    fin, fout = 4, 8                      # fin != fout -> learned 1x1 shortcut path

    x = jax.random.normal(kx, (n, fin, h, w), jnp.float32)
    params = make_params(fin, fout, kp)
    ref_f32 = reference_forward(x, params)

    # Exact-semantics path (f32 matmul operands), multi-tile grid (row_tile=8 -> 2 tiles/image)
    # exercising the cross-tile BN accumulation.
    out_f32 = jax.block_until_ready(
        nons_block_forward(x, params, matmul_dtype=jnp.float32, row_tile=8))
    np.testing.assert_allclose(np.asarray(out_f32), np.asarray(ref_f32),
                               rtol=1e-3, atol=1e-4)

    # MXU-native bf16 operand path (f32 accumulation), vs a bf16-matched reference.
    out_bf16 = jax.block_until_ready(
        nons_block_forward(x, params, matmul_dtype=jnp.bfloat16, row_tile=8))
    ref_bf16 = reference_forward(x, params, matmul_dtype=jnp.bfloat16)
    np.testing.assert_allclose(np.asarray(out_bf16), np.asarray(ref_bf16),
                               rtol=1e-2, atol=1e-2)

    # fin == fout -> identity shortcut (no ws input), default row-tile heuristic.
    params_same = make_params(fin, fin, kp2)
    ref_same = reference_forward(x, params_same)
    out_same = jax.block_until_ready(
        nons_block_forward(x, params_same, matmul_dtype=jnp.float32))
    np.testing.assert_allclose(np.asarray(out_same), np.asarray(ref_same),
                               rtol=1e-3, atol=1e-4)

    print("KERNEL_OK")
</pallas_src>

<mosaic_0001>
module attributes {stable_mosaic.version = 11 : i64} {
  func.func @_conv3x3_stats_kernel(%arg0: i32, %arg1: i32, %arg2: memref<1x1x10x24x4xf32, #tpu.memory_space<vmem>>, %arg3: memref<36x4xf32, #tpu.memory_space<vmem>>, %arg4: memref<1x8x16x4xf32, #tpu.memory_space<vmem>>, %arg5: memref<1x2x4xf32, #tpu.memory_space<vmem>>) attributes {dimension_semantics = [#tpu.dimension_semantics<parallel>, #tpu.dimension_semantics<arbitrary>], iteration_bounds = array<i64: 2, 2>, scalar_prefetch = 0 : i64, scratch_operands = 0 : i64, tpu.core_type = #tpu.core_type<tc>, window_params = [{transform_indices = @transform_0, window_bounds = array<i64: 1, 1, 10, 24, 4>}, {pipeline_mode = #tpu.pipeline_mode<synchronous>, transform_indices = @transform_1, window_bounds = array<i64: 36, 4>}, {transform_indices = @transform_2, window_bounds = array<i64: 1, 8, 16, 4>}, {transform_indices = @transform_3, window_bounds = array<i64: 1, 2, 4>}]} {
    %c0 = arith.constant 0 : index
    %c0_0 = arith.constant 0 : index
    %c0_1 = arith.constant 0 : index
    %c0_2 = arith.constant 0 : index
    %c0_3 = arith.constant 0 : index
    %0 = vector.load %arg2[%c0, %c0_0, %c0_1, %c0_2, %c0_3] : memref<1x1x10x24x4xf32, #tpu.memory_space<vmem>>, vector<1x1x10x24x4xf32>
    %1 = vector.shape_cast %0 : vector<1x1x10x24x4xf32> to vector<10x24x4xf32>
    %cst = arith.constant 0.000000e+00 : f32
    %2 = vector.broadcast %cst : f32 to vector<128x4xf32>
    %3 = vector.extract_strided_slice %1 {offsets = [0, 0, 0], sizes = [8, 16, 4], strides = [1, 1, 1]} : vector<10x24x4xf32> to vector<8x16x4xf32>
    %4 = vector.extract_strided_slice %1 {offsets = [0, 1, 0], sizes = [8, 16, 4], strides = [1, 1, 1]} : vector<10x24x4xf32> to vector<8x16x4xf32>
    %5 = vector.extract_strided_slice %1 {offsets = [0, 2, 0], sizes = [8, 16, 4], strides = [1, 1, 1]} : vector<10x24x4xf32> to vector<8x16x4xf32>
    %6 = tpu.concatenate %3, %4, %5 in 2 : vector<8x16x4xf32>, vector<8x16x4xf32>, vector<8x16x4xf32> -> vector<8x16x12xf32>
    %7 = vector.shape_cast %6 : vector<8x16x12xf32> to vector<128x12xf32>
    %c0_4 = arith.constant 0 : index
    %c0_5 = arith.constant 0 : index
    %8 = vector.load %arg3[%c0_4, %c0_5] : memref<36x4xf32, #tpu.memory_space<vmem>>, vector<12x4xf32>
    %cst_6 = arith.constant dense<0.000000e+00> : vector<128x4xf32>
    %9 = tpu.matmul %7, %8, %cst_6 {dimension_numbers = #tpu.dot_dimension_numbers<[1], [0], [0], [1], [0, 0, 1, 1], [], []>} : vector<128x12xf32>, vector<12x4xf32>, vector<128x4xf32> -> vector<128x4xf32>
    %10 = arith.addf %2, %9 : vector<128x4xf32>
    %11 = vector.extract_strided_slice %1 {offsets = [1, 0, 0], sizes = [8, 16, 4], strides = [1, 1, 1]} : vector<10x24x4xf32> to vector<8x16x4xf32>
    %12 = vector.extract_strided_slice %1 {offsets = [1, 1, 0], sizes = [8, 16, 4], strides = [1, 1, 1]} : vector<10x24x4xf32> to vector<8x16x4xf32>
    %13 = vector.extract_strided_slice %1 {offsets = [1, 2, 0], sizes = [8, 16, 4], strides = [1, 1, 1]} : vector<10x24x4xf32> to vector<8x16x4xf32>
    %14 = tpu.concatenate %11, %12, %13 in 2 : vector<8x16x4xf32>, vector<8x16x4xf32>, vector<8x16x4xf32> -> vector<8x16x12xf32>
    %15 = vector.shape_cast %14 : vector<8x16x12xf32> to vector<128x12xf32>
    %c12 = arith.constant 12 : index
    %c0_7 = arith.constant 0 : index
    %16 = vector.load %arg3[%c12, %c0_7] : memref<36x4xf32, #tpu.memory_space<vmem>>, vector<12x4xf32>
    %cst_8 = arith.constant dense<0.000000e+00> : vector<128x4xf32>
    %17 = tpu.matmul %15, %16, %cst_8 {dimension_numbers = #tpu.dot_dimension_numbers<[1], [0], [0], [1], [0, 0, 1, 1], [], []>} : vector<128x12xf32>, vector<12x4xf32>, vector<128x4xf32> -> vector<128x4xf32>
    %18 = arith.addf %10, %17 : vector<128x4xf32>
    %19 = vector.extract_strided_slice %1 {offsets = [2, 0, 0], sizes = [8, 16, 4], strides = [1, 1, 1]} : vector<10x24x4xf32> to vector<8x16x4xf32>
    %20 = vector.extract_strided_slice %1 {offsets = [2, 1, 0], sizes = [8, 16, 4], strides = [1, 1, 1]} : vector<10x24x4xf32> to vector<8x16x4xf32>
    %21 = vector.extract_strided_slice %1 {offsets = [2, 2, 0], sizes = [8, 16, 4], strides = [1, 1, 1]} : vector<10x24x4xf32> to vector<8x16x4xf32>
    %22 = tpu.concatenate %19, %20, %21 in 2 : vector<8x16x4xf32>, vector<8x16x4xf32>, vector<8x16x4xf32> -> vector<8x16x12xf32>
    %23 = vector.shape_cast %22 : vector<8x16x12xf32> to vector<128x12xf32>
    %c24 = arith.constant 24 : index
    %c0_9 = arith.constant 0 : index
    %24 = vector.load %arg3[%c24, %c0_9] : memref<36x4xf32, #tpu.memory_space<vmem>>, vector<12x4xf32>
    %cst_10 = arith.constant dense<0.000000e+00> : vector<128x4xf32>
    %25 = tpu.matmul %23, %24, %cst_10 {dimension_numbers = #tpu.dot_dimension_numbers<[1], [0], [0], [1], [0, 0, 1, 1], [], []>} : vector<128x12xf32>, vector<12x4xf32>, vector<128x4xf32> -> vector<128x4xf32>
    %26 = arith.addf %18, %25 : vector<128x4xf32>
    %27 = vector.shape_cast %26 : vector<128x4xf32> to vector<8x16x4xf32>
    %c0_11 = arith.constant 0 : index
    %c0_12 = arith.constant 0 : index
    %c0_13 = arith.constant 0 : index
    %c0_14 = arith.constant 0 : index
    %28 = vector.load %arg4[%c0_11, %c0_12, %c0_13, %c0_14] : memref<1x8x16x4xf32, #tpu.memory_space<vmem>>, vector<1x8x16x4xf32>
    %29 = vector.shape_cast %28 : vector<1x8x16x4xf32> to vector<8x16x4xf32>
    %30 = vector.shape_cast %27 : vector<8x16x4xf32> to vector<1x8x16x4xf32>
    tpu.vector_store %arg4[%c0_11, %c0_12, %c0_13, %c0_14], %30 {strides = array<i32>} : memref<1x8x16x4xf32, #tpu.memory_space<vmem>>, vector<1x8x16x4xf32>,
    %cst_15 = arith.constant dense<0.000000e+00> : vector<4xf32>
    %31 = vector.multi_reduction <add>, %26, %cst_15 [0] : vector<128x4xf32> to vector<4xf32>
    %32 = vector.shape_cast %31 : vector<4xf32> to vector<1x4xf32>
    %33 = arith.mulf %26, %26 : vector<128x4xf32>
    %cst_16 = arith.constant dense<0.000000e+00> : vector<4xf32>
    %34 = vector.multi_reduction <add>, %33, %cst_16 [0] : vector<128x4xf32> to vector<4xf32>
    %35 = vector.shape_cast %34 : vector<4xf32> to vector<1x4xf32>
    %c0_i32 = arith.constant 0 : i32
    %36 = arith.cmpi eq, %arg1, %c0_i32 : i32
    %37 = arith.extui %36 : i1 to i32
    %c0_i32_17 = arith.constant 0 : i32
    %38 = arith.cmpi ne, %37, %c0_i32_17 : i32
    scf.if %38 {
      %cst_24 = arith.constant 0.000000e+00 : f32
      %46 = vector.broadcast %cst_24 : f32 to vector<2x4xf32>
      %c0_25 = arith.constant 0 : index
      %c0_26 = arith.constant 0 : index
      %c0_27 = arith.constant 0 : index
      %47 = vector.load %arg5[%c0_25, %c0_26, %c0_27] : memref<1x2x4xf32, #tpu.memory_space<vmem>>, vector<1x2x4xf32>
      %48 = vector.shape_cast %47 : vector<1x2x4xf32> to vector<2x4xf32>
      %49 = vector.shape_cast %46 : vector<2x4xf32> to vector<1x2x4xf32>
      tpu.vector_store %arg5[%c0_25, %c0_26, %c0_27], %49 {strides = array<i32>} : memref<1x2x4xf32, #tpu.memory_space<vmem>>, vector<1x2x4xf32>,
    } else {
    }
    %c0_18 = arith.constant 0 : index
    %c0_19 = arith.constant 0 : index
    %c0_20 = arith.constant 0 : index
    %39 = vector.load %arg5[%c0_18, %c0_19, %c0_20] : memref<1x2x4xf32, #tpu.memory_space<vmem>>, vector<1x2x4xf32>
    %40 = vector.shape_cast %39 : vector<1x2x4xf32> to vector<2x4xf32>
    %41 = tpu.concatenate %32, %35 in 0 : vector<1x4xf32>, vector<1x4xf32> -> vector<2x4xf32>
    %42 = arith.addf %40, %41 : vector<2x4xf32>
    %c0_21 = arith.constant 0 : index
    %c0_22 = arith.constant 0 : index
    %c0_23 = arith.constant 0 : index
    %43 = vector.load %arg5[%c0_21, %c0_22, %c0_23] : memref<1x2x4xf32, #tpu.memory_space<vmem>>, vector<1x2x4xf32>
    %44 = vector.shape_cast %43 : vector<1x2x4xf32> to vector<2x4xf32>
    %45 = vector.shape_cast %42 : vector<2x4xf32> to vector<1x2x4xf32>
    tpu.vector_store %arg5[%c0_21, %c0_22, %c0_23], %45 {strides = array<i32>} : memref<1x2x4xf32, #tpu.memory_space<vmem>>, vector<1x2x4xf32>,
    return
  }
  func.func @transform_0(%arg0: i32, %arg1: i32) -> (i32, i32, i32, i32, i32) {
    %c0_i32 = arith.constant 0 : i32
    %c0_i32_0 = arith.constant 0 : i32
    %c0_i32_1 = arith.constant 0 : i32
    %c0_i32_2 = arith.constant 0 : i32
    return %arg0, %arg1, %c0_i32, %c0_i32_0, %c0_i32_1 : i32, i32, i32, i32, i32
  }
  func.func @transform_1(%arg0: i32, %arg1: i32) -> (i32, i32) {
    %c0_i32 = arith.constant 0 : i32
    %c0_i32_0 = arith.constant 0 : i32
    %c0_i32_1 = arith.constant 0 : i32
    return %c0_i32, %c0_i32_0 : i32, i32
  }
  func.func @transform_2(%arg0: i32, %arg1: i32) -> (i32, i32, i32, i32) {
    %c0_i32 = arith.constant 0 : i32
    %c0_i32_0 = arith.constant 0 : i32
    %c0_i32_1 = arith.constant 0 : i32
    return %arg0, %arg1, %c0_i32, %c0_i32_0 : i32, i32, i32, i32
  }
  func.func @transform_3(%arg0: i32, %arg1: i32) -> (i32, i32, i32) {
    %c0_i32 = arith.constant 0 : i32
    %c0_i32_0 = arith.constant 0 : i32
    %c0_i32_1 = arith.constant 0 : i32
    return %arg0, %c0_i32, %c0_i32_0 : i32, i32, i32
  }
}

</mosaic_0001>

<llo_original>
// kernel: tpu_custom_call.1
$region0: #{tpu_custom_call.1}
  #allocation0 [shape = 'u32[]', space=smem, size = 0x4, offset = 0x4, fixed_abs, tag = 'smem constant byte address 0x4 - core index']
  #allocation1 [shape = 'u32[72,128]{1,0:T(1,128)}', space=vmem, size = 0x9000, scoped, tag = 'internal scratch']
  %s0 = inlined_call_operand.vmem [shape: f32[2,2,10,24,4], index: 0, kind: input, shape index: {}]
  %s1 = inlined_call_operand.vmem [shape: f32[36,4], index: 1, kind: input, shape index: {}]
  %s2 = inlined_call_operand.vmem [shape: f32[2,16,16,4], index: 2, kind: output, shape index: {0}]
  %s3 = inlined_call_operand.hbm [shape: f32[2,2,4], index: 3, kind: output, shape index: {1}]
  %4 = xla_tuple %s2, %s3
  %s5 = sld [smem:[#allocation0]]
  $region53: #{tpu_custom_call.1} parent=0
    _
  %s7 = ssub.s32 1, %s5
  %s8 = scalar_select 0, %s7, %s5
  $region1: #{tpu_custom_call.1} parent=0
    #allocation2 [shape = 'u8[2048]{0}', space=vmem, size = 0x800, scoped, tag = 'output window, operand 1']
    #allocation3 [shape = 's32[2]{0}', space=sflag, size = 0x8, scoped, tag = 'scoped memory for tpu_custom_call.1']
    %9 = vsyncpa [#allocation3], 0
    %s10 = scalar_lea.sflag [#allocation3], 1
    %11 = vsyncpa %s10, 0
    loop: start=0, step=1, limit=6
    $region2: #{tpu_custom_call.1} parent=1 // loop_pre_header
      _
    $region3: #{tpu_custom_call.1} parent=1 // loop_header
      %s13 = sphi 0, %s17
      %p14 = scmp.ge.s32.totalorder %s13, 6
      %s20 = sphi 0, %s32
      %s21 = sphi 0, %s28
      %s22 = sphi 0, %s20
      %s23 = sphi 0, %s21
      %s24 = sphi 0, %s22
      %s25 = sphi 0, %s23
      %s37 = sphi 0, %s39
      %s40 = sphi 0, %s37
      %s41 = sphi 0, %s40
      %s57 = sphi 0, %s41
      %s61 = sphi 0, %s61
      %s63 = sphi 0, %s61
      %s64 = sphi 0, %s63
      %s78 = sphi 0, %s64
      %s86 = sphi 0, %s88
      %s89 = sphi 0, %s86
      %s90 = sphi 0, %s89
      %s106 = sphi 0, %s90
      %s112 = sphi 0, %s114
      %s115 = sphi 0, %s112
      %s116 = sphi 0, %s115
      %s132 = sphi 0, %s116
    $region4: #{tpu_custom_call.1} parent=1 // loop_header_branch
      %16 = sbr.rel (%p14) target = $region8
    $region5: #{tpu_custom_call.1} parent=1 // loop_body
      %s18 = ssub.s32 %s13, 1
      %s19 = ssub.s32 %s13, 2
      %s26 = sadd.s32 1, %s21
      %p27 = scmp.ge.s32.totalorder %s26, 2
      %s28 = scalar_select %p27, 0, %s26
      %s29 = sadd.s32 1, %s20
      %s30 = scalar_select %p27, %s29, %s20
      %p31 = scmp.ge.s32.totalorder %s30, 2
      %s32 = scalar_select %p31, 0, %s30
      %s33 = ssub.s32 %s20, %s32
      %s34 = ssub.s32 %s21, %s28
      %s35 = sor.u32 %s33, %s34
      %p36 = scmp.eq.s32.totalorder %s35, 0
      %s38 = sadd.s32 %s37, 1
      %s39 = scalar_select %p36, %s37, %s38
      %p42 = pneg %p36
      %p43 = scmp.eq.s32.totalorder %s13, 3
      %p44 = por %p42, %p43
      %p45 = scmp.ne.s32.totalorder %s37, %s40
      %p46 = scmp.eq.s32.totalorder %s13, 0
      %p47 = por %p45, %p46
      %p48 = scmp.ne.s32.totalorder %s37, %s40
      %p49 = scmp.eq.s32.totalorder %s18, 3
      %p50 = por %p48, %p49
      %p51 = scmp.ne.s32.totalorder %s40, %s41
      %p52 = scmp.eq.s32.totalorder %s18, 0
      %p53 = por %p51, %p52
      %p54 = scmp.ne.s32.totalorder %s40, %s41
      %p55 = scmp.eq.s32.totalorder %s19, 3
      %p56 = por %p54, %p55
      %p58 = scmp.ne.s32.totalorder %s41, %s57
      %p59 = scmp.eq.s32.totalorder %s19, 0
      %p60 = por %p58, %p59
      %s62 = sadd.s32 %s61, 1
      %p65 = scmp.eq.s32.totalorder %s13, 3
      %p66 = scmp.ne.s32.totalorder %s61, %s63
      %p67 = scmp.eq.s32.totalorder %s13, 0
      %p68 = por %p66, %p67
      %p69 = scmp.ne.s32.totalorder %s61, %s63
      %p70 = scmp.eq.s32.totalorder %s18, 3
      %p71 = por %p69, %p70
      %p72 = scmp.ne.s32.totalorder %s63, %s64
      %p73 = scmp.eq.s32.totalorder %s18, 0
      %p74 = por %p72, %p73
      %p75 = scmp.ne.s32.totalorder %s63, %s64
      %p76 = scmp.eq.s32.totalorder %s19, 3
      %p77 = por %p75, %p76
      %p79 = scmp.ne.s32.totalorder %s64, %s78
      %p80 = scmp.eq.s32.totalorder %s19, 0
      %p81 = por %p79, %p80
      %s82 = ssub.s32 %s20, %s32
      %s83 = ssub.s32 %s21, %s28
      %s84 = sor.u32 %s82, %s83
      %p85 = scmp.eq.s32.totalorder %s84, 0
      %s87 = sadd.s32 %s86, 1
      %s88 = scalar_select %p85, %s86, %s87
      %p91 = pneg %p85
      %p92 = scmp.eq.s32.totalorder %s13, 3
      %p93 = por %p91, %p92
      %p94 = scmp.ne.s32.totalorder %s86, %s89
      %p95 = scmp.eq.s32.totalorder %s13, 0
      %p96 = por %p94, %p95
      %p97 = scmp.ne.s32.totalorder %s86, %s89
      %p98 = scmp.eq.s32.totalorder %s18, 3
      %p99 = por %p97, %p98
      %p100 = scmp.ne.s32.totalorder %s89, %s90
      %p101 = scmp.eq.s32.totalorder %s18, 0
      %p102 = por %p100, %p101
      %p103 = scmp.ne.s32.totalorder %s89, %s90
      %p104 = scmp.eq.s32.totalorder %s19, 3
      %p105 = por %p103, %p104
      %p107 = scmp.ne.s32.totalorder %s90, %s106
      %p108 = scmp.eq.s32.totalorder %s19, 0
      %p109 = por %p107, %p108
      %s110 = ssub.s32 %s20, %s32
      %p111 = scmp.eq.s32.totalorder %s110, 0
      %s113 = sadd.s32 %s112, 1
      %s114 = scalar_select %p111, %s112, %s113
      %p117 = pneg %p111
      %p118 = scmp.eq.s32.totalorder %s13, 3
      %p119 = por %p117, %p118
      %p120 = scmp.ne.s32.totalorder %s112, %s115
      %p121 = scmp.eq.s32.totalorder %s13, 0
      %p122 = por %p120, %p121
      %p123 = scmp.ne.s32.totalorder %s112, %s115
      %p124 = scmp.eq.s32.totalorder %s18, 3
      %p125 = por %p123, %p124
      %p126 = scmp.ne.s32.totalorder %s115, %s116
      %p127 = scmp.eq.s32.totalorder %s18, 0
      %p128 = por %p126, %p127
      %p129 = scmp.ne.s32.totalorder %s115, %s116
      %p130 = scmp.eq.s32.totalorder %s19, 3
      %p131 = por %p129, %p130
      %p133 = scmp.ne.s32.totalorder %s116, %s132
      %p134 = scmp.eq.s32.totalorder %s19, 0
      %p135 = por %p133, %p134
      %p136 = scmp.le.s32.totalorder 1, %s13
      %p137 = scmp.lt.s32.totalorder %s13, 5
      %p138 = pnand %p136, %p137
      %p139 = pneg %p138
      // Predicated region
      $region9: #{tpu_custom_call.1} parent=5 // pred_check
        _
      $region10: #{tpu_custom_call.1} parent=5 // pred_check_branch
        %141 = sbr.rel (%p138) target = $region12
      $region11: #{tpu_custom_call.1} parent=5 // pred_region
        %s142 = ssub.s32 %s13, 1
        // Predicated region
        $region13: #{tpu_custom_call.1} parent=11 // pred_check
          %p143 = pneg %p74
        $region14: #{tpu_custom_call.1} parent=11 // pred_check_branch
          %145 = sbr.rel (%p143) target = $region16
        $region15: #{tpu_custom_call.1} parent=11 // pred_region
          _
        $region16: #{tpu_custom_call.1} parent=11 // pred_fallthru
          _
      $region12: #{tpu_custom_call.1} parent=5 // pred_fallthru
        _
      %p146 = scmp.lt.s32.totalorder %s13, 4
      // Predicated region
      $region17: #{tpu_custom_call.1} parent=5 // pred_check
        %p147 = pneg %p146
      $region18: #{tpu_custom_call.1} parent=5 // pred_check_branch
        %149 = sbr.rel (%p147) target = $region20
      $region19: #{tpu_custom_call.1} parent=5 // pred_region
        // Predicated region
        $region21: #{tpu_custom_call.1} parent=19 // pred_check
          %p150 = pneg %p47
        $region22: #{tpu_custom_call.1} parent=19 // pred_check_branch
          %152 = sbr.rel (%p150) target = $region24
        $region23: #{tpu_custom_call.1} parent=19 // pred_region
          %p153 = scmp.lt.s32.totalorder %s20, 1
          %s154 = scalar_select %p153, %s20, 1
          %p155 = scmp.lt.s32.totalorder %s21, 1
          %s156 = scalar_select %p155, %s21, 1
          %s157 = smul.addr %s156, 30
          %s158 = smul.addr %s154, 60
          %s159 = sadd.s32 %s157, %s158
          %s160 = smul.addr %s159, 8
          %s161 = scalar_lea.vmem %s0, %s160
        $region24: #{tpu_custom_call.1} parent=19 // pred_fallthru
          _
      $region20: #{tpu_custom_call.1} parent=5 // pred_fallthru
        _
      %p162 = scmp.le.s32.totalorder 1, %s13
      %p163 = scmp.lt.s32.totalorder %s13, 5
      %p164 = pnand %p162, %p163
      %p165 = pneg %p164
      // Predicated region
      $region25: #{tpu_custom_call.1} parent=5 // pred_check
        _
      $region26: #{tpu_custom_call.1} parent=5 // pred_check_branch
        %167 = sbr.rel (%p164) target = $region28
      $region27: #{tpu_custom_call.1} parent=5 // pred_region
        %s168 = ssub.s32 %s13, 1
        %p169 = scmp.lt.s32.totalorder %s22, 1
        %s170 = scalar_select %p169, %s22, 1
        %p171 = scmp.lt.s32.totalorder %s23, 1
        %s172 = scalar_select %p171, %s23, 1
        %s173 = smul.addr %s172, 30
        %s174 = smul.addr %s170, 60
        %s175 = sadd.s32 %s173, %s174
        %s176 = smul.addr %s175, 8
        %s177 = scalar_lea.vmem %s0, %s176
        %p178 = pneg %p53
        %p179 = pneg %p50
        %p180 = pneg %p74
        %p181 = pneg %p71
        %p182 = pneg %p102
        %p183 = pneg %p99
        %s184 = smul.u32 8, %s23
        %p185 = scmp.lt.s32.totalorder %s22, 1
        %s186 = scalar_select %p185, %s22, 1
        %p187 = scmp.lt.s32.totalorder %s184, 15
        %s188 = scalar_select %p187, %s184, 15
        %s189 = smul.addr %s188, 2
        %s190 = smul.addr %s186, 32
        %s191 = sadd.s32 %s189, %s190
        %s192 = smul.addr %s191, 8
        %s193 = scalar_lea.vmem %s2, %s192
        %p194 = pneg %p128
        %p195 = pneg %p125
        %s196 = sand.u32 %s115, 1
        %s197 = scalar_lea.sflag [#allocation3], %s196
        %s198 = sand.u32 %s115, 1
        %s199 = smul.addr %s198, 2
        %s200 = scalar_lea.vmem [#allocation2], %s199
        %p201 = scmp.lt.s32.totalorder %s22, 1
        %s202 = scalar_select %p201, %s22, 1
        %p203 = scmp.lt.s32.totalorder %s23, 1
        %s204 = scalar_select %p203, %s23, 1
        %s205 = smul.addr %s204, 30
        %s206 = smul.addr %s202, 60
        %s207 = sadd.s32 %s205, %s206
        %s208 = smul.addr %s207, 8
        %s209 = scalar_lea.vmem %s0, %s208
        %s210 = smul.u32 8, %s23
        %p211 = scmp.lt.s32.totalorder %s22, 1
        %s212 = scalar_select %p211, %s22, 1
        %p213 = scmp.lt.s32.totalorder %s210, 15
        %s214 = scalar_select %p213, %s210, 15
        %s215 = smul.addr %s214, 2
        %s216 = smul.addr %s212, 32
        %s217 = sadd.s32 %s215, %s216
        %s218 = smul.addr %s217, 8
        %s219 = scalar_lea.vmem %s2, %s218
        %s220 = smul.u32 8, %s23
        %v221 = vld [vmem:[%s209] sm:$0xff]
        %v222 = vld [vmem:[%s209 + $0x8] sm:$0xff]
        %v223 = vld [vmem:[%s209 + $0x10] sm:$0xff]
        %v224 = vld [vmem:[%s209 + $0x18] sm:$0xff]
        %v225 = vld [vmem:[%s209 + $0x20] sm:$0xff]
        %v226 = vld [vmem:[%s209 + $0x28] sm:$0xff]
        %v227 = vld [vmem:[%s209 + $0x30] sm:$0xff]
        %v228 = vld [vmem:[%s209 + $0x38] sm:$0xff]
        %v229 = vld [vmem:[%s209 + $0x40] sm:$0xff]
        %v230 = vld [vmem:[%s209 + $0x48] sm:$0xff]
        %v231 = vld [vmem:[%s209 + $0x50] sm:$0xff]
        %v232 = vld [vmem:[%s209 + $0x58] sm:$0xff]
        %v233 = vld [vmem:[%s209 + $0x60] sm:$0xff]
        %v234 = vld [vmem:[%s209 + $0x68] sm:$0xff]
        %v235 = vld [vmem:[%s209 + $0x70] sm:$0xff]
        %v236 = vld [vmem:[%s209 + $0x78] sm:$0xff]
        %v237 = vld [vmem:[%s209 + $0x80] sm:$0xff]
        %v238 = vld [vmem:[%s209 + $0x88] sm:$0xff]
        %v239 = vld [vmem:[%s209 + $0x90] sm:$0xff]
        %v240 = vld [vmem:[%s209 + $0x98] sm:$0xff]
        %v241 = vld [vmem:[%s209 + $0xa0] sm:$0xff]
        %v242 = vld [vmem:[%s209 + $0xa8] sm:$0xff]
        %v243 = vld [vmem:[%s209 + $0xb0] sm:$0xff]
        %v244 = vld [vmem:[%s209 + $0xb8] sm:$0xff]
        %v245 = vld [vmem:[%s209 + $0xc0] sm:$0xff]
        %v246 = vld [vmem:[%s209 + $0xc8] sm:$0xff]
        %v247 = vld [vmem:[%s209 + $0xd0] sm:$0xff]
        %v248 = vld [vmem:[%s209 + $0xd8] sm:$0xff]
        %v249 = vld [vmem:[%s209 + $0xe0] sm:$0xff]
        %v250 = vld [vmem:[%s209 + $0xe8] sm:$0xff]
        %vm275 = vcmask 1046528
        %v276 = vrot.slane %v221, 1
        %v277 = vrot.slane %v222, 1
        %v278 = vsel %vm275, %v276, %v277
        %v279 = vrot.slane %v223, 1
        %v280 = vsel %vm275, %v277, %v279
        %v281 = vrot.slane %v224, 1
        %v282 = vrot.slane %v225, 1
        %v283 = vsel %vm275, %v281, %v282
        %v284 = vrot.slane %v226, 1
        %v285 = vsel %vm275, %v282, %v284
        %v286 = vrot.slane %v227, 1
        %v287 = vrot.slane %v228, 1
        %v288 = vsel %vm275, %v286, %v287
        %v289 = vrot.slane %v229, 1
        %v290 = vsel %vm275, %v287, %v289
        %v291 = vrot.slane %v230, 1
        %v292 = vrot.slane %v231, 1
        %v293 = vsel %vm275, %v291, %v292
        %v294 = vrot.slane %v232, 1
        %v295 = vsel %vm275, %v292, %v294
        %v296 = vrot.slane %v233, 1
        %v297 = vrot.slane %v234, 1
        %v298 = vsel %vm275, %v296, %v297
        %v299 = vrot.slane %v235, 1
        %v300 = vsel %vm275, %v297, %v299
        %v301 = vrot.slane %v236, 1
        %v302 = vrot.slane %v237, 1
        %v303 = vsel %vm275, %v301, %v302
        %v304 = vrot.slane %v238, 1
        %v305 = vsel %vm275, %v302, %v304
        %v306 = vrot.slane %v239, 1
        %v307 = vrot.slane %v240, 1
        %v308 = vsel %vm275, %v306, %v307
        %v309 = vrot.slane %v241, 1
        %v310 = vsel %vm275, %v307, %v309
        %v311 = vrot.slane %v242, 1
        %v312 = vrot.slane %v243, 1
        %v313 = vsel %vm275, %v311, %v312
        %v314 = vrot.slane %v244, 1
        %v315 = vsel %vm275, %v312, %v314
        %316 = vrot.lane.b32.xlu0 %v278, 4
        %v317 = vpop.permute.xlu0 %316
        %318 = vrot.lane.b32.xlu0 %v280, 4
        %v319 = vpop.permute.xlu0 %318
        %320 = vrot.lane.b32.xlu0 %v283, 4
        %v321 = vpop.permute.xlu0 %320
        %322 = vrot.lane.b32.xlu0 %v285, 4
        %v323 = vpop.permute.xlu0 %322
        %324 = vrot.lane.b32.xlu0 %v288, 4
        %v325 = vpop.permute.xlu0 %324
        %326 = vrot.lane.b32.xlu0 %v290, 4
        %v327 = vpop.permute.xlu0 %326
        %328 = vrot.lane.b32.xlu0 %v293, 4
        %v329 = vpop.permute.xlu0 %328
        %330 = vrot.lane.b32.xlu0 %v295, 4
        %v331 = vpop.permute.xlu0 %330
        %332 = vrot.lane.b32.xlu0 %v298, 4
        %v333 = vpop.permute.xlu0 %332
        %334 = vrot.lane.b32.xlu0 %v300, 4
        %v335 = vpop.permute.xlu0 %334
        %336 = vrot.lane.b32.xlu0 %v303, 4
        %v337 = vpop.permute.xlu0 %336
        %338 = vrot.lane.b32.xlu0 %v305, 4
        %v339 = vpop.permute.xlu0 %338
        %340 = vrot.lane.b32.xlu0 %v308, 4
        %v341 = vpop.permute.xlu0 %340
        %342 = vrot.lane.b32.xlu0 %v310, 4
        %v343 = vpop.permute.xlu0 %342
        %344 = vrot.lane.b32.xlu0 %v313, 4
        %v345 = vpop.permute.xlu0 %344
        %346 = vrot.lane.b32.xlu0 %v315, 4
        %v347 = vpop.permute.xlu0 %346
        %vm364 = vcmask 1045504
        %v365 = vrot.slane %v221, 2
        %v366 = vrot.slane %v222, 2
        %v367 = vsel %vm364, %v365, %v366
        %v368 = vrot.slane %v223, 2
        %v369 = vsel %vm364, %v366, %v368
        %v370 = vrot.slane %v224, 2
        %v371 = vrot.slane %v225, 2
        %v372 = vsel %vm364, %v370, %v371
        %v373 = vrot.slane %v226, 2
        %v374 = vsel %vm364, %v371, %v373
        %v375 = vrot.slane %v227, 2
        %v376 = vrot.slane %v228, 2
        %v377 = vsel %vm364, %v375, %v376
        %v378 = vrot.slane %v229, 2
        %v379 = vsel %vm364, %v376, %v378
        %v380 = vrot.slane %v230, 2
        %v381 = vrot.slane %v231, 2
        %v382 = vsel %vm364, %v380, %v381
        %v383 = vrot.slane %v232, 2
        %v384 = vsel %vm364, %v381, %v383
        %v385 = vrot.slane %v233, 2
        %v386 = vrot.slane %v234, 2
        %v387 = vsel %vm364, %v385, %v386
        %v388 = vrot.slane %v235, 2
        %v389 = vsel %vm364, %v386, %v388
        %v390 = vrot.slane %v236, 2
        %v391 = vrot.slane %v237, 2
        %v392 = vsel %vm364, %v390, %v391
        %v393 = vrot.slane %v238, 2
        %v394 = vsel %vm364, %v391, %v393
        %v395 = vrot.slane %v239, 2
        %v396 = vrot.slane %v240, 2
        %v397 = vsel %vm364, %v395, %v396
        %v398 = vrot.slane %v241, 2
        %v399 = vsel %vm364, %v396, %v398
        %v400 = vrot.slane %v242, 2
        %v401 = vrot.slane %v243, 2
        %v402 = vsel %vm364, %v400, %v401
        %v403 = vrot.slane %v244, 2
        %v404 = vsel %vm364, %v401, %v403
        %405 = vrot.lane.b32.xlu0 %v367, 8
        %v406 = vpop.permute.xlu0 %405
        %407 = vrot.lane.b32.xlu0 %v369, 8
        %v408 = vpop.permute.xlu0 %407
        %409 = vrot.lane.b32.xlu0 %v372, 8
        %v410 = vpop.permute.xlu0 %409
        %411 = vrot.lane.b32.xlu0 %v374, 8
        %v412 = vpop.permute.xlu0 %411
        %413 = vrot.lane.b32.xlu0 %v377, 8
        %v414 = vpop.permute.xlu0 %413
        %415 = vrot.lane.b32.xlu0 %v379, 8
        %v416 = vpop.permute.xlu0 %415
        %417 = vrot.lane.b32.xlu0 %v382, 8
        %v418 = vpop.permute.xlu0 %417
        %419 = vrot.lane.b32.xlu0 %v384, 8
        %v420 = vpop.permute.xlu0 %419
        %421 = vrot.lane.b32.xlu0 %v387, 8
        %v422 = vpop.permute.xlu0 %421
        %423 = vrot.lane.b32.xlu0 %v389, 8
        %v424 = vpop.permute.xlu0 %423
        %425 = vrot.lane.b32.xlu0 %v392, 8
        %v426 = vpop.permute.xlu0 %425
        %427 = vrot.lane.b32.xlu0 %v394, 8
        %v428 = vpop.permute.xlu0 %427
        %429 = vrot.lane.b32.xlu0 %v397, 8
        %v430 = vpop.permute.xlu0 %429
        %431 = vrot.lane.b32.xlu0 %v399, 8
        %v432 = vpop.permute.xlu0 %431
        %433 = vrot.lane.b32.xlu0 %v402, 8
        %v434 = vpop.permute.xlu0 %433
        %435 = vrot.lane.b32.xlu0 %v404, 8
        %v436 = vpop.permute.xlu0 %435
        %vm453 = vcmask 31744
        %v454 = vsel %vm453, %v221, %v317
        %v455 = vsel %vm453, %v222, %v319
        %v456 = vsel %vm453, %v224, %v321
        %v457 = vsel %vm453, %v225, %v323
        %v458 = vsel %vm453, %v227, %v325
        %v459 = vsel %vm453, %v228, %v327
        %v460 = vsel %vm453, %v230, %v329
        %v461 = vsel %vm453, %v231, %v331
        %v462 = vsel %vm453, %v233, %v333
        %v463 = vsel %vm453, %v234, %v335
        %v464 = vsel %vm453, %v236, %v337
        %v465 = vsel %vm453, %v237, %v339
        %v466 = vsel %vm453, %v239, %v341
        %v467 = vsel %vm453, %v240, %v343
        %v468 = vsel %vm453, %v242, %v345
        %v469 = vsel %vm453, %v243, %v347
        %vm470 = vcmask 64512
        %v471 = vsel %vm470, %v454, %v406
        %v472 = vsel %vm470, %v455, %v408
        %v473 = vsel %vm470, %v456, %v410
        %v474 = vsel %vm470, %v457, %v412
        %v475 = vsel %vm470, %v458, %v414
        %v476 = vsel %vm470, %v459, %v416
        %v477 = vsel %vm470, %v460, %v418
        %v478 = vsel %vm470, %v461, %v420
        %v479 = vsel %vm470, %v462, %v422
        %v480 = vsel %vm470, %v463, %v424
        %v481 = vsel %vm470, %v464, %v426
        %v482 = vsel %vm470, %v465, %v428
        %v483 = vsel %vm470, %v466, %v430
        %v484 = vsel %vm470, %v467, %v432
        %v485 = vsel %vm470, %v468, %v434
        %v486 = vsel %vm470, %v469, %v436
        %v487 = vld [vmem:[%s1] sm:$0xff]
        %v488 = vld [vmem:[%s1 + $0x8] sm:$0xf]
        %v492 = vrot.slane %v245, 1
        %v493 = vrot.slane %v246, 1
        %v494 = vsel %vm275, %v492, %v493
        %v495 = vrot.slane %v247, 1
        %v496 = vsel %vm275, %v493, %v495
        %497 = vrot.lane.b32.xlu0 %v494, 4
        %v498 = vpop.permute.xlu0 %497
        %499 = vrot.lane.b32.xlu0 %v496, 4
        %v500 = vpop.permute.xlu0 %499
        %v503 = vrot.slane %v245, 2
        %v504 = vrot.slane %v246, 2
        %v505 = vsel %vm364, %v503, %v504
        %v506 = vrot.slane %v247, 2
        %v507 = vsel %vm364, %v504, %v506
        %508 = vrot.lane.b32.xlu0 %v505, 8
        %v509 = vpop.permute.xlu0 %508
        %510 = vrot.lane.b32.xlu0 %v507, 8
        %v511 = vpop.permute.xlu0 %510
        %v514 = vsel %vm453, %v245, %v498
        %v515 = vsel %vm453, %v246, %v500
        %v516 = vsel %vm470, %v514, %v509
        %v517 = vsel %vm470, %v515, %v511
        %v518 = vld [vmem:[%s1 + $0xc] sm:$0xff]
        %v519 = vld [vmem:[%s1 + $0x14] sm:$0xf]
        %vm520 = vcmask 97280
        %v522 = vsel %vm520, %v473, 0
        %v525 = vsel %vm520, %v474, 0
        %v528 = vsel %vm520, %v475, 0
        %v531 = vsel %vm520, %v476, 0
        %v534 = vsel %vm520, %v477, 0
        %v537 = vsel %vm520, %v478, 0
        %v540 = vsel %vm520, %v479, 0
        %v543 = vsel %vm520, %v480, 0
        %v546 = vsel %vm520, %v481, 0
        %v549 = vsel %vm520, %v482, 0
        %v552 = vsel %vm520, %v483, 0
        %v555 = vsel %vm520, %v484, 0
        %v558 = vsel %vm520, %v485, 0
        %v561 = vsel %vm520, %v486, 0
        %v564 = vsel %vm520, %v516, 0
        %v567 = vsel %vm520, %v517, 0
        %vm569 = vcmask 1043456
        %v571 = vsel %vm569, %v519, 0
        %573 = vmatpush.msra.mxu0 0.0
        %574 = vmatpush.msra.mxu0 0.0
        %575 = vmatpush.msra.mxu0 0.0
        %576 = vmatpush.msra.mxu0 0.0
        %577 = vmatpush.msra.mxu0 0.0
        %578 = vmatpush.msra.mxu0 0.0
        %579 = vmatpush.msra.mxu0 0.0
        %580 = vmatpush.msra.mxu0 0.0
        %581 = vmatpush.msra.mxu0 0.0
        %582 = vmatpush.msra.mxu0 0.0
        %583 = vmatpush.msra.mxu0 0.0
        %584 = vmatpush.msra.mxu0 0.0
        %585 = vmatpush.msra.mxu0 0.0
        %586 = vmatpush.msra.mxu0 0.0
        %587 = vmatpush.msra.mxu0 %v571
        %588 = vmatpush.msra.mxu0 %v518
        %589 = vmatmul.f32.gmra.mxu0 %v522
        %v590 = vpop.f32.mrf.mxu0
        %v591 = vadd.f32 0.0, %v590
        %592 = vmatmul.f32.gmra.mxu0 %v525
        %v593 = vpop.f32.mrf.mxu0
        %v594 = vadd.f32 0.0, %v593
        %595 = vmatmul.f32.gmra.mxu0 %v528
        %v596 = vpop.f32.mrf.mxu0
        %v597 = vadd.f32 0.0, %v596
        %598 = vmatmul.f32.gmra.mxu0 %v531
        %v599 = vpop.f32.mrf.mxu0
        %v600 = vadd.f32 0.0, %v599
        %601 = vmatmul.f32.gmra.mxu0 %v534
        %v602 = vpop.f32.mrf.mxu0
        %v603 = vadd.f32 0.0, %v602
        %604 = vmatmul.f32.gmra.mxu0 %v537
        %v605 = vpop.f32.mrf.mxu0
        %v606 = vadd.f32 0.0, %v605
        %607 = vmatmul.f32.gmra.mxu0 %v540
        %v608 = vpop.f32.mrf.mxu0
        %v609 = vadd.f32 0.0, %v608
        %610 = vmatmul.f32.gmra.mxu0 %v543
        %v611 = vpop.f32.mrf.mxu0
        %v612 = vadd.f32 0.0, %v611
        %613 = vmatmul.f32.gmra.mxu0 %v546
        %v614 = vpop.f32.mrf.mxu0
        %v615 = vadd.f32 0.0, %v614
        %616 = vmatmul.f32.gmra.mxu0 %v549
        %v617 = vpop.f32.mrf.mxu0
        %v618 = vadd.f32 0.0, %v617
        %619 = vmatmul.f32.gmra.mxu0 %v552
        %v620 = vpop.f32.mrf.mxu0
        %v621 = vadd.f32 0.0, %v620
        %622 = vmatmul.f32.gmra.mxu0 %v555
        %v623 = vpop.f32.mrf.mxu0
        %v624 = vadd.f32 0.0, %v623
        %625 = vmatmul.f32.gmra.mxu0 %v558
        %v626 = vpop.f32.mrf.mxu0
        %v627 = vadd.f32 0.0, %v626
        %628 = vmatmul.f32.gmra.mxu0 %v561
        %v629 = vpop.f32.mrf.mxu0
        %v630 = vadd.f32 0.0, %v629
        %631 = vmatmul.f32.gmra.mxu0 %v564
        %v632 = vpop.f32.mrf.mxu0
        %v633 = vadd.f32 0.0, %v632
        %634 = vmatmul.f32.gmra.mxu0 %v567
        %v635 = vpop.f32.mrf.mxu0
        %v636 = vadd.f32 0.0, %v635
        %637 = vdwg.mxu0
        %v639 = vsel %vm520, %v471, 0
        %v642 = vsel %vm520, %v472, 0
        %v645 = vsel %vm569, %v488, 0
        %647 = vmatpush.msra.mxu0 0.0
        %648 = vmatpush.msra.mxu0 0.0
        %649 = vmatpush.msra.mxu0 0.0
        %650 = vmatpush.msra.mxu0 0.0
        %651 = vmatpush.msra.mxu0 0.0
        %652 = vmatpush.msra.mxu0 0.0
        %653 = vmatpush.msra.mxu0 0.0
        %654 = vmatpush.msra.mxu0 0.0
        %655 = vmatpush.msra.mxu0 0.0
        %656 = vmatpush.msra.mxu0 0.0
        %657 = vmatpush.msra.mxu0 0.0
        %658 = vmatpush.msra.mxu0 0.0
        %659 = vmatpush.msra.mxu0 0.0
        %660 = vmatpush.msra.mxu0 0.0
        %661 = vmatpush.msra.mxu0 %v645
        %662 = vmatpush.msra.mxu0 %v487
        %663 = vmatmul.f32.gmra.mxu0 %v639
        %v664 = vpop.f32.mrf.mxu0
        %v665 = vadd.f32 %v591, %v664
        %666 = vmatmul.f32.gmra.mxu0 %v642
        %v667 = vpop.f32.mrf.mxu0
        %v668 = vadd.f32 %v594, %v667
        %669 = vmatmul.f32.gmra.mxu0 %v522
        %v670 = vpop.f32.mrf.mxu0
        %v671 = vadd.f32 %v597, %v670
        %672 = vmatmul.f32.gmra.mxu0 %v525
        %v673 = vpop.f32.mrf.mxu0
        %v674 = vadd.f32 %v600, %v673
        %675 = vmatmul.f32.gmra.mxu0 %v528
        %v676 = vpop.f32.mrf.mxu0
        %v677 = vadd.f32 %v603, %v676
        %678 = vmatmul.f32.gmra.mxu0 %v531
        %v679 = vpop.f32.mrf.mxu0
        %v680 = vadd.f32 %v606, %v679
        %681 = vmatmul.f32.gmra.mxu0 %v534
        %v682 = vpop.f32.mrf.mxu0
        %v683 = vadd.f32 %v609, %v682
        %684 = vmatmul.f32.gmra.mxu0 %v537
        %v685 = vpop.f32.mrf.mxu0
        %v686 = vadd.f32 %v612, %v685
        %687 = vmatmul.f32.gmra.mxu0 %v540
        %v688 = vpop.f32.mrf.mxu0
        %v689 = vadd.f32 %v615, %v688
        %690 = vmatmul.f32.gmra.mxu0 %v543
        %v691 = vpop.f32.mrf.mxu0
        %v692 = vadd.f32 %v618, %v691
        %693 = vmatmul.f32.gmra.mxu0 %v546
        %v694 = vpop.f32.mrf.mxu0
        %v695 = vadd.f32 %v621, %v694
        %696 = vmatmul.f32.gmra.mxu0 %v549
        %v697 = vpop.f32.mrf.mxu0
        %v698 = vadd.f32 %v624, %v697
        %699 = vmatmul.f32.gmra.mxu0 %v552
        %v700 = vpop.f32.mrf.mxu0
        %v701 = vadd.f32 %v627, %v700
        %702 = vmatmul.f32.gmra.mxu0 %v555
        %v703 = vpop.f32.mrf.mxu0
        %v704 = vadd.f32 %v630, %v703
        %705 = vmatmul.f32.gmra.mxu0 %v558
        %v706 = vpop.f32.mrf.mxu0
        %v707 = vadd.f32 %v633, %v706
        %708 = vmatmul.f32.gmra.mxu0 %v561
        %v709 = vpop.f32.mrf.mxu0
        %v710 = vadd.f32 %v636, %v709
        %711 = vdwg.mxu0
        %v715 = vrot.slane %v248, 1
        %v716 = vrot.slane %v249, 1
        %v717 = vsel %vm275, %v715, %v716
        %v718 = vrot.slane %v250, 1
        %v719 = vsel %vm275, %v716, %v718
        %720 = vrot.lane.b32.xlu0 %v717, 4
        %v721 = vpop.permute.xlu0 %720
        %722 = vrot.lane.b32.xlu0 %v719, 4
        %v723 = vpop.permute.xlu0 %722
        %v726 = vrot.slane %v248, 2
        %v727 = vrot.slane %v249, 2
        %v728 = vsel %vm364, %v726, %v727
        %v729 = vrot.slane %v250, 2
        %v730 = vsel %vm364, %v727, %v729
        %731 = vrot.lane.b32.xlu0 %v728, 8
        %v732 = vpop.permute.xlu0 %731
        %733 = vrot.lane.b32.xlu0 %v730, 8
        %v734 = vpop.permute.xlu0 %733
        %v737 = vsel %vm453, %v248, %v721
        %v738 = vsel %vm453, %v249, %v723
        %v739 = vsel %vm470, %v737, %v732
        %v740 = vsel %vm470, %v738, %v734
        %v741 = vld [vmem:[%s1 + $0x18] sm:$0xff]
        %v742 = vld [vmem:[%s1 + $0x20] sm:$0xf]
        %v744 = vsel %vm520, %v739, 0
        %v747 = vsel %vm520, %v740, 0
        %v750 = vsel %vm569, %v742, 0
        %752 = vmatpush.msra.mxu0 0.0
        %753 = vmatpush.msra.mxu0 0.0
        %754 = vmatpush.msra.mxu0 0.0
        %755 = vmatpush.msra.mxu0 0.0
        %756 = vmatpush.msra.mxu0 0.0
        %757 = vmatpush.msra.mxu0 0.0
        %758 = vmatpush.msra.mxu0 0.0
        %759 = vmatpush.msra.mxu0 0.0
        %760 = vmatpush.msra.mxu0 0.0
        %761 = vmatpush.msra.mxu0 0.0
        %762 = vmatpush.msra.mxu0 0.0
        %763 = vmatpush.msra.mxu0 0.0
        %764 = vmatpush.msra.mxu0 0.0
        %765 = vmatpush.msra.mxu0 0.0
        %766 = vmatpush.msra.mxu0 %v750
        %767 = vmatpush.msra.mxu0 %v741
        %768 = vmatmul.f32.gmra.mxu0 %v528
        %v769 = vpop.f32.mrf.mxu0
        %v770 = vadd.f32 0.0, %v769
        %771 = vmatmul.f32.gmra.mxu0 %v531
        %v772 = vpop.f32.mrf.mxu0
        %v773 = vadd.f32 0.0, %v772
        %774 = vmatmul.f32.gmra.mxu0 %v534
        %v775 = vpop.f32.mrf.mxu0
        %v776 = vadd.f32 0.0, %v775
        %777 = vmatmul.f32.gmra.mxu0 %v537
        %v778 = vpop.f32.mrf.mxu0
        %v779 = vadd.f32 0.0, %v778
        %780 = vmatmul.f32.gmra.mxu0 %v540
        %v781 = vpop.f32.mrf.mxu0
        %v782 = vadd.f32 0.0, %v781
        %783 = vmatmul.f32.gmra.mxu0 %v543
        %v784 = vpop.f32.mrf.mxu0
        %v785 = vadd.f32 0.0, %v784
        %786 = vmatmul.f32.gmra.mxu0 %v546
        %v787 = vpop.f32.mrf.mxu0
        %v788 = vadd.f32 0.0, %v787
        %789 = vmatmul.f32.gmra.mxu0 %v549
        %v790 = vpop.f32.mrf.mxu0
        %v791 = vadd.f32 0.0, %v790
        %792 = vmatmul.f32.gmra.mxu0 %v552
        %v793 = vpop.f32.mrf.mxu0
        %v794 = vadd.f32 0.0, %v793
        %795 = vmatmul.f32.gmra.mxu0 %v555
        %v796 = vpop.f32.mrf.mxu0
        %v797 = vadd.f32 0.0, %v796
        %798 = vmatmul.f32.gmra.mxu0 %v558
        %v799 = vpop.f32.mrf.mxu0
        %v800 = vadd.f32 0.0, %v799
        %801 = vmatmul.f32.gmra.mxu0 %v561
        %v802 = vpop.f32.mrf.mxu0
        %v803 = vadd.f32 0.0, %v802
        %804 = vmatmul.f32.gmra.mxu0 %v564
        %v805 = vpop.f32.mrf.mxu0
        %v806 = vadd.f32 0.0, %v805
        %807 = vmatmul.f32.gmra.mxu0 %v567
        %v808 = vpop.f32.mrf.mxu0
        %v809 = vadd.f32 0.0, %v808
        %810 = vmatmul.f32.gmra.mxu0 %v744
        %v811 = vpop.f32.mrf.mxu0
        %v812 = vadd.f32 0.0, %v811
        %813 = vmatmul.f32.gmra.mxu0 %v747
        %v814 = vpop.f32.mrf.mxu0
        %v815 = vadd.f32 0.0, %v814
        %816 = vdwg.mxu0
        %v817 = vadd.f32 %v665, %v770
        %v818 = vadd.f32 %v668, %v773
        %v819 = vadd.f32 %v671, %v776
        %v820 = vadd.f32 %v674, %v779
        %v821 = vadd.f32 %v677, %v782
        %v822 = vadd.f32 %v680, %v785
        %v823 = vadd.f32 %v683, %v788
        %v824 = vadd.f32 %v686, %v791
        %v825 = vadd.f32 %v689, %v794
        %v826 = vadd.f32 %v692, %v797
        %v827 = vadd.f32 %v695, %v800
        %v828 = vadd.f32 %v698, %v803
        %v829 = vadd.f32 %v701, %v806
        %v830 = vadd.f32 %v704, %v809
        %v831 = vadd.f32 %v707, %v812
        %v832 = vadd.f32 %v710, %v815
        %833 = vst.msk [vmem:[%s219] sm:$0xff] %vm453, %v817
        %834 = vst.msk [vmem:[%s219 + $0x8] sm:$0xff] %vm453, %v818
        %835 = vst.msk [vmem:[%s219 + $0x10] sm:$0xff] %vm453, %v819
        %836 = vst.msk [vmem:[%s219 + $0x18] sm:$0xff] %vm453, %v820
        %837 = vst.msk [vmem:[%s219 + $0x20] sm:$0xff] %vm453, %v821
        %838 = vst.msk [vmem:[%s219 + $0x28] sm:$0xff] %vm453, %v822
        %839 = vst.msk [vmem:[%s219 + $0x30] sm:$0xff] %vm453, %v823
        %840 = vst.msk [vmem:[%s219 + $0x38] sm:$0xff] %vm453, %v824
        %841 = vst.msk [vmem:[%s219 + $0x40] sm:$0xff] %vm453, %v825
        %842 = vst.msk [vmem:[%s219 + $0x48] sm:$0xff] %vm453, %v826
        %843 = vst.msk [vmem:[%s219 + $0x50] sm:$0xff] %vm453, %v827
        %844 = vst.msk [vmem:[%s219 + $0x58] sm:$0xff] %vm453, %v828
        %845 = vst.msk [vmem:[%s219 + $0x60] sm:$0xff] %vm453, %v829
        %846 = vst.msk [vmem:[%s219 + $0x68] sm:$0xff] %vm453, %v830
        %847 = vst.msk [vmem:[%s219 + $0x70] sm:$0xff] %vm453, %v831
        %848 = vst.msk [vmem:[%s219 + $0x78] sm:$0xff] %vm453, %v832
        %v849 = vsel %vm453, %v817, 0.0
        %v850 = vsel %vm453, %v818, 0.0
        %v851 = vadd.f32 %v849, %v850
        %v852 = vsel %vm453, %v819, 0.0
        %v853 = vadd.f32 %v851, %v852
        %v854 = vsel %vm453, %v820, 0.0
        %v855 = vadd.f32 %v853, %v854
        %v856 = vsel %vm453, %v821, 0.0
        %v857 = vadd.f32 %v855, %v856
        %v858 = vsel %vm453, %v822, 0.0
        %v859 = vadd.f32 %v857, %v858
        %v860 = vsel %vm453, %v823, 0.0
        %v861 = vadd.f32 %v859, %v860
        %v862 = vsel %vm453, %v824, 0.0
        %v863 = vadd.f32 %v861, %v862
        %v864 = vsel %vm453, %v825, 0.0
        %v865 = vadd.f32 %v863, %v864
        %v866 = vsel %vm453, %v826, 0.0
        %v867 = vadd.f32 %v865, %v866
        %v868 = vsel %vm453, %v827, 0.0
        %v869 = vadd.f32 %v867, %v868
        %v870 = vsel %vm453, %v828, 0.0
        %v871 = vadd.f32 %v869, %v870
        %v872 = vsel %vm453, %v829, 0.0
        %v873 = vadd.f32 %v871, %v872
        %v874 = vsel %vm453, %v830, 0.0
        %v875 = vadd.f32 %v873, %v874
        %v876 = vsel %vm453, %v831, 0.0
        %v877 = vadd.f32 %v875, %v876
        %v878 = vsel %vm453, %v832, 0.0
        %v879 = vadd.f32 %v877, %v878
        %v880 = vrot.slane %v879, 4
        %v881 = vadd.f32 %v879, %v880
        %v882 = vrot.slane %v881, 2
        %v883 = vadd.f32 %v881, %v882
        %v884 = vrot.slane %v883, 1
        %v885 = vadd.f32 %v883, %v884
        %v886 = vmul.f32 %v817, %v817
        %v887 = vmul.f32 %v818, %v818
        %v888 = vmul.f32 %v819, %v819
        %v889 = vmul.f32 %v820, %v820
        %v890 = vmul.f32 %v821, %v821
        %v891 = vmul.f32 %v822, %v822
        %v892 = vmul.f32 %v823, %v823
        %v893 = vmul.f32 %v824, %v824
        %v894 = vmul.f32 %v825, %v825
        %v895 = vmul.f32 %v826, %v826
        %v896 = vmul.f32 %v827, %v827
        %v897 = vmul.f32 %v828, %v828
        %v898 = vmul.f32 %v829, %v829
        %v899 = vmul.f32 %v830, %v830
        %v900 = vmul.f32 %v831, %v831
        %v901 = vmul.f32 %v832, %v832
        %v902 = vsel %vm453, %v886, 0.0
        %v903 = vsel %vm453, %v887, 0.0
        %v904 = vadd.f32 %v902, %v903
        %v905 = vsel %vm453, %v888, 0.0
        %v906 = vadd.f32 %v904, %v905
        %v907 = vsel %vm453, %v889, 0.0
        %v908 = vadd.f32 %v906, %v907
        %v909 = vsel %vm453, %v890, 0.0
        %v910 = vadd.f32 %v908, %v909
        %v911 = vsel %vm453, %v891, 0.0
        %v912 = vadd.f32 %v910, %v911
        %v913 = vsel %vm453, %v892, 0.0
        %v914 = vadd.f32 %v912, %v913
        %v915 = vsel %vm453, %v893, 0.0
        %v916 = vadd.f32 %v914, %v915
        %v917 = vsel %vm453, %v894, 0.0
        %v918 = vadd.f32 %v916, %v917
        %v919 = vsel %vm453, %v895, 0.0
        %v920 = vadd.f32 %v918, %v919
        %v921 = vsel %vm453, %v896, 0.0
        %v922 = vadd.f32 %v920, %v921
        %v923 = vsel %vm453, %v897, 0.0
        %v924 = vadd.f32 %v922, %v923
        %v925 = vsel %vm453, %v898, 0.0
        %v926 = vadd.f32 %v924, %v925
        %v927 = vsel %vm453, %v899, 0.0
        %v928 = vadd.f32 %v926, %v927
        %v929 = vsel %vm453, %v900, 0.0
        %v930 = vadd.f32 %v928, %v929
        %v931 = vsel %vm453, %v901, 0.0
        %v932 = vadd.f32 %v930, %v931
        %v933 = vrot.slane %v932, 4
        %v934 = vadd.f32 %v932, %v933
        %v935 = vrot.slane %v934, 2
        %v936 = vadd.f32 %v934, %v935
        %v937 = vrot.slane %v936, 1
        %v938 = vadd.f32 %v936, %v937
        %p939 = scmp.eq.s32.totalorder %s23, 0
        // Predicated region
        $region29: #{tpu_custom_call.1} parent=27 // pred_check
          %p940 = pneg %p939
        $region30: #{tpu_custom_call.1} parent=27 // pred_check_branch
          %942 = sbr.rel (%p940) target = $region32
        $region31: #{tpu_custom_call.1} parent=27 // pred_region
          %vm943 = vcmask 25600
          %944 = vst.msk [vmem:[%s200] sm:$0x3] %vm943, 0.0
        $region32: #{tpu_custom_call.1} parent=27 // pred_fallthru
          _
        %v945 = vld [vmem:[%s200] sm:$0x3]
        %vm946 = vcmask 1040384
        %v947 = vsel %vm946, %v885, %v938
        %v948 = vadd.f32 %v945, %v947
        %vm949 = vcmask 25600
        %950 = vst.msk [vmem:[%s200] sm:$0x3] %vm949, %v948
        %s951 = smul.u32 8, %s23
        %p952 = scmp.lt.s32.totalorder %s22, 1
        %s953 = scalar_select %p952, %s22, 1
        %p954 = scmp.lt.s32.totalorder %s951, 15
        %s955 = scalar_select %p954, %s951, 15
        %s956 = smul.addr %s955, 2
        %s957 = smul.addr %s953, 32
        %s958 = sadd.s32 %s956, %s957
        %s959 = smul.addr %s958, 8
        %s960 = scalar_lea.vmem %s2, %s959
        %s961 = sand.u32 %s115, 1
        %s962 = scalar_lea.sflag [#allocation3], %s961
        %s963 = sand.u32 %s115, 1
        %s964 = smul.addr %s963, 2
        %s965 = scalar_lea.vmem [#allocation2], %s964
        // Predicated region
        $region33: #{tpu_custom_call.1} parent=27 // pred_check
          %p966 = pneg %p99
        $region34: #{tpu_custom_call.1} parent=27 // pred_check_branch
          %968 = sbr.rel (%p966) target = $region36
        $region35: #{tpu_custom_call.1} parent=27 // pred_region
          %s969 = smul.u32 8, %s23
        $region36: #{tpu_custom_call.1} parent=27 // pred_fallthru
          _
        // Predicated region
        $region37: #{tpu_custom_call.1} parent=27 // pred_check
          %p970 = pneg %p125
        $region38: #{tpu_custom_call.1} parent=27 // pred_check_branch
          %972 = sbr.rel (%p970) target = $region40
        $region39: #{tpu_custom_call.1} parent=27 // pred_region
          %974 = vsyncadd %s962, 0
          %s975 = smul.addr %s22, 2
          %s976 = scalar_lea.hbm %s3, %s975
          %s978 = sshll.u32 %s965, 4
          %s979 = int_to_ptr.vmem [resolvable:$true] %s978
          %s980 = sshll.u32 %s976, 4
          %s981 = int_to_ptr.hbm [resolvable:$true] %s980
          %983 = dma.vmem_to_hbm [thread:$0]  %s979, 32, %s981, %s962
        $region40: #{tpu_custom_call.1} parent=27 // pred_fallthru
          _
      $region28: #{tpu_custom_call.1} parent=5 // pred_fallthru
        _
      %p984 = scmp.le.s32.totalorder 2, %s13
      // Predicated region
      $region41: #{tpu_custom_call.1} parent=5 // pred_check
        %p985 = pneg %p984
      $region42: #{tpu_custom_call.1} parent=5 // pred_check_branch
        %987 = sbr.rel (%p985) target = $region44
      $region43: #{tpu_custom_call.1} parent=5 // pred_region
        %s988 = ssub.s32 %s13, 2
        // Predicated region
        $region45: #{tpu_custom_call.1} parent=43 // pred_check
          %p989 = pneg %p105
        $region46: #{tpu_custom_call.1} parent=43 // pred_check_branch
          %991 = sbr.rel (%p989) target = $region48
        $region47: #{tpu_custom_call.1} parent=43 // pred_region
          %s992 = smul.u32 8, %s25
          %p993 = scmp.lt.s32.totalorder %s24, 1
          %s994 = scalar_select %p993, %s24, 1
          %p995 = scmp.lt.s32.totalorder %s992, 15
          %s996 = scalar_select %p995, %s992, 15
          %s997 = smul.addr %s996, 2
          %s998 = smul.addr %s994, 32
          %s999 = sadd.s32 %s997, %s998
          %s1000 = smul.addr %s999, 8
          %s1001 = scalar_lea.vmem %s2, %s1000
        $region48: #{tpu_custom_call.1} parent=43 // pred_fallthru
          _
        // Predicated region
        $region49: #{tpu_custom_call.1} parent=43 // pred_check
          %p1002 = pneg %p131
        $region50: #{tpu_custom_call.1} parent=43 // pred_check_branch
          %1004 = sbr.rel (%p1002) target = $region52
        $region51: #{tpu_custom_call.1} parent=43 // pred_region
          %s1005 = sand.u32 %s116, 1
          %s1006 = scalar_lea.sflag [#allocation3], %s1005
          %s1007 = sand.u32 %s116, 1
          %s1008 = smul.addr %s1007, 2
          %s1009 = scalar_lea.vmem [#allocation2], %s1008
          %1011 = dma.done %s1006, 32
        $region52: #{tpu_custom_call.1} parent=43 // pred_fallthru
          _
      $region44: #{tpu_custom_call.1} parent=5 // pred_fallthru
        _
    $region6: #{tpu_custom_call.1} parent=1 // loop_footer
      %s17 = sadd.s32 1, %s13
    $region7: #{tpu_custom_call.1} parent=1 // loop_footer_branch
      %12 = sbr.rel target = $region3
    $region8: #{tpu_custom_call.1} parent=1 // loop_exit
      _
    %1012 = vsyncpa [#allocation3], 1
    %s1013 = scalar_lea.sflag [#allocation3], 1
    %1014 = vsyncpa %s1013, 1

</llo_original>
